<compile_context>
chip_gen: v7x
topology: tpu7x:2x2x1
jax: 0.10.0
libtpu: 0.0.40
codegen_flags: <defaults>
</compile_context>

<pallas_src>
import functools

import jax
import jax.numpy as jnp
from jax import lax
from jax.experimental import pallas as pl
from jax.experimental.pallas import tpu as pltpu

_LANE = 128
_SUBLANE = 8


def _cdiv(a, b):
    return -(-a // b)


def _round_up(x, m):
    return _cdiv(x, m) * m


# --------------------------------------------------------------------------
# Kernel 1: streamed global average pool over the HW axis of (B*C, HW) x.
# --------------------------------------------------------------------------
def _avg_pool_kernel(x_ref, o_ref, acc_ref, *, true_hw, num_hw_steps, group):
    # x_ref:   (rowT, hwT)   current spatial tile (native dtype)
    # o_ref:   (rowT, 1)     f32 per-row means (resident across the hw axis)
    # acc_ref: (rowT, 128)   f32 lane-aligned running partial sums
    rows, hw_tile = x_ref.shape
    s = pl.program_id(1)
    inv_hw = 1.0 / float(true_hw)

    # Tiny-HW case (HW < 128): single step, direct reduce, accumulator unused.
    if hw_tile < _LANE:
        total = jnp.sum(x_ref[...].astype(jnp.float32), axis=-1, keepdims=True)
        o_ref[...] = (total * inv_hw).astype(o_ref.dtype)
        return

    def accumulate(valid):
        # `valid` (static): number of in-bounds columns in this hw step.
        full = valid // _LANE
        part = valid % _LANE

        def load(chunk_idx, dynamic=False):
            off = chunk_idx * _LANE
            if dynamic:
                off = pl.multiple_of(off, _LANE)
            return x_ref[:, pl.ds(off, _LANE)].astype(jnp.float32)

        # Group `group` chunks per accumulator RMW to cut acc VMEM traffic
        # (v5e has a single vector-store slot).
        n_groups, tail = divmod(full, group)
        if n_groups > 0:
            unroll = True if n_groups <= 8 else 4

            def body(g, carry):
                base = g * group
                psum = load(base, dynamic=True)
                for j in range(1, group):
                    psum = psum + load(base + j, dynamic=True)
                acc_ref[...] += psum
                return carry

            lax.fori_loop(0, n_groups, body, 0, unroll=unroll)
        if tail > 0:
            base = n_groups * group                     # static
            psum = load(base)
            for j in range(1, tail):
                psum = psum + load(base + j)
            acc_ref[...] += psum
        if part > 0:
            # Masked, lane-aligned tail chunk (only the last hw step is ragged;
            # the garbage lanes beyond `part` are zeroed by the select).
            off = full * _LANE                          # static, in-bounds
            lane = lax.broadcasted_iota(jnp.int32, (rows, _LANE), 1)
            chunk = x_ref[:, pl.ds(off, _LANE)].astype(jnp.float32)
            acc_ref[...] += jnp.where(lane < part, chunk, 0.0)

    @pl.when(s == 0)
    def _init():
        acc_ref[...] = jnp.zeros_like(acc_ref)

    last_valid = true_hw - (num_hw_steps - 1) * hw_tile
    if num_hw_steps > 1:
        @pl.when(s < num_hw_steps - 1)
        def _mid():
            accumulate(hw_tile)

        @pl.when(s == num_hw_steps - 1)
        def _last():
            accumulate(last_valid)
    else:
        accumulate(last_valid)

    @pl.when(s == num_hw_steps - 1)
    def _finalize():
        total = jnp.sum(acc_ref[...], axis=-1, keepdims=True)   # (rowT, 1)
        o_ref[...] = (total * inv_hw).astype(o_ref.dtype)


def _tile_target_bytes():
    # Bigger x tiles on 128 MiB-VMEM parts (v5e/v6e); conservative elsewhere
    # (v7x has 64 MiB per TensorCore).
    try:
        info = pltpu.get_tpu_info()
        if int(info.vmem_capacity_bytes) >= 100 * 1024 * 1024:
            return 8 * 1024 * 1024
    except Exception:
        pass
    return 4 * 1024 * 1024


def _global_avg_pool(x_2d, true_hw):
    """x_2d: (R, HW) folded activations -> (R, 1) f32 per-row means."""
    R, HW = x_2d.shape
    itemsize = jnp.dtype(x_2d.dtype).itemsize
    tile_target = _tile_target_bytes()

    # ---- Row tile (sublane axis): any multiple of 8, or the full extent. ----
    row_cap = 2048                                  # keeps the f32 acc <= 1 MiB
    if R <= _SUBLANE:
        rowT = R
    else:
        col_hint = min(_round_up(HW, _LANE), 2048)
        want_rows = max(_SUBLANE, tile_target // (col_hint * itemsize))
        rowT = min((want_rows // _SUBLANE) * _SUBLANE, row_cap,
                   (R // _SUBLANE) * _SUBLANE)
        if R >= 2 * _SUBLANE:
            # Guarantee >= 2 row tiles so the 'parallel' axis can feed both
            # v7x TensorCores even at small batch.
            rowT = min(rowT, _round_up(_cdiv(R, 2), _SUBLANE))
        rowT = max(rowT, _SUBLANE)

    # ---- HW tile (lane axis): multiple of 128, minimal rounding waste. ------
    max_cols = max(_LANE, (tile_target // (rowT * itemsize)) // _LANE * _LANE)
    if HW < _LANE:
        hwT, steps = HW, 1
    else:
        steps = _cdiv(HW, max_cols)
        if HW % _LANE != 0:
            steps = max(steps, 2)       # keep hwT a multiple of 128 and <= HW
        hwT = _round_up(_cdiv(HW, steps), _LANE)
        hwT = min(hwT, (HW // _LANE) * _LANE)
        steps = _cdiv(HW, hwT)

    grid = (_cdiv(R, rowT), steps)
    kernel = functools.partial(_avg_pool_kernel, true_hw=HW,
                               num_hw_steps=steps, group=4)

    cost = pl.CostEstimate(
        flops=int(R * HW),
        transcendentals=0,
        bytes_accessed=int(R * HW * itemsize + R * 4),
    )

    return pl.pallas_call(
        kernel,
        out_shape=jax.ShapeDtypeStruct((R, 1), jnp.float32),
        grid_spec=pltpu.PrefetchScalarGridSpec(
            num_scalar_prefetch=0,
            grid=grid,
            in_specs=[pl.BlockSpec((rowT, hwT), lambda r, s: (r, s))],
            out_specs=pl.BlockSpec((rowT, 1), lambda r, s: (r, 0)),
            scratch_shapes=[pltpu.VMEM((rowT, _LANE), jnp.float32)],
        ),
        compiler_params=pltpu.CompilerParams(
            dimension_semantics=("parallel", "arbitrary"),
            vmem_limit_bytes=32 * 1024 * 1024,
        ),
        cost_estimate=cost,
    )(x_2d)


# --------------------------------------------------------------------------
# Kernel 2: fc1 -> ReLU -> fc2 -> sigmoid on the tiny pooled (B, C) vector.
# --------------------------------------------------------------------------
def _fc_kernel(p_ref, w1t_ref, w2t_ref, o_ref):
    pooled = p_ref[...]                                   # (Bp, Cp) f32
    w1t = w1t_ref[...]                                    # (Cp, Cmp) native dtype
    w2t = w2t_ref[...]                                    # (Cmp, Cp) native dtype
    a = pooled if pooled.dtype == w1t.dtype else pooled.astype(w1t.dtype)
    h = jnp.dot(a, w1t, preferred_element_type=jnp.float32)
    h = jnp.maximum(h, 0.0)
    h = h if h.dtype == w2t.dtype else h.astype(w2t.dtype)
    y = jnp.dot(h, w2t, preferred_element_type=jnp.float32)
    o_ref[...] = jax.nn.sigmoid(y).astype(o_ref.dtype)


def _fc_sigmoid(pooled, w1t, w2t, out_dtype):
    Bsz, C = pooled.shape
    Cm = w1t.shape[1]

    Bp = _round_up(Bsz, _SUBLANE)
    Cp = _round_up(C, _LANE)
    Cmp = _round_up(Cm, _LANE)

    w_itemsize = jnp.dtype(w1t.dtype).itemsize
    vmem_need = 4 * Cp * Cmp * w_itemsize + 4 * Bp * (Cp + Cmp) * 4
    if vmem_need > 20 * 1024 * 1024:
        # Very large C: weights would crowd VMEM — let XLA do the tiny matmuls
        # (pooled tensor is only B*C*4 bytes of extra HBM traffic).
        a = pooled if pooled.dtype == w1t.dtype else pooled.astype(w1t.dtype)
        h = jnp.maximum(jnp.dot(a, w1t, preferred_element_type=jnp.float32), 0.0)
        h = h if h.dtype == w2t.dtype else h.astype(w2t.dtype)
        y = jnp.dot(h, w2t, preferred_element_type=jnp.float32)
        return jax.nn.sigmoid(y).astype(out_dtype)

    # Zero-pad only the tiny fc operands to MXU-friendly shapes (negligible).
    pooled_p = jnp.pad(pooled, ((0, Bp - Bsz), (0, Cp - C)))
    w1t_p = jnp.pad(w1t, ((0, Cp - C), (0, Cmp - Cm)))
    w2t_p = jnp.pad(w2t, ((0, Cmp - Cm), (0, Cp - C)))

    out = pl.pallas_call(
        _fc_kernel,
        out_shape=jax.ShapeDtypeStruct((Bp, Cp), out_dtype),
        grid=(1,),
        in_specs=[
            pl.BlockSpec((Bp, Cp), lambda i: (0, 0)),
            pl.BlockSpec((Cp, Cmp), lambda i: (0, 0)),
            pl.BlockSpec((Cmp, Cp), lambda i: (0, 0)),
        ],
        out_specs=pl.BlockSpec((Bp, Cp), lambda i: (0, 0)),
        compiler_params=pltpu.CompilerParams(
            dimension_semantics=("arbitrary",),
            vmem_limit_bytes=32 * 1024 * 1024,
        ),
    )(pooled_p, w1t_p, w2t_p)
    return out[:Bsz, :C]


# --------------------------------------------------------------------------
# Public wrapper: matches the PyTorch ChannelAttention forward.
# --------------------------------------------------------------------------
def channel_attention(x_nchw, w1, w2):
    """x_nchw: (B, C, H, W); w1: (C//2, C, 1, 1); w2: (C, C//2, 1, 1).

    Returns (B, C, 1, 1) attention weights (same dtype as x).
    """
    B, C, H, W = x_nchw.shape
    Cm = w1.shape[0]
    HW = H * W

    # Fold (B, C) onto the sublane axis; pure reshape, no padded copy of x.
    x_2d = x_nchw.reshape(B * C, HW)
    pooled = _global_avg_pool(x_2d, HW).reshape(B, C)     # (B, C) f32 means

    # 1x1 convs == matmuls on the pooled channel vector.
    w1t = w1.reshape(Cm, C).T                             # (C, Cm)
    w2t = w2.reshape(C, Cm).T                             # (Cm, C)
    att = _fc_sigmoid(pooled, w1t, w2t, x_nchw.dtype)     # (B, C)
    return att.reshape(B, C, 1, 1)


def reference(x_nchw, w1, w2):
    B, C, H, W = x_nchw.shape
    Cm = w1.shape[0]
    avg = jnp.mean(x_nchw.astype(jnp.float32), axis=(2, 3))          # (B, C)
    h = jnp.maximum(avg @ w1.reshape(Cm, C).T, 0.0)                  # (B, Cm)
    y = jax.nn.sigmoid(h @ w2.reshape(C, Cm).T)                      # (B, C)
    return y.reshape(B, C, 1, 1).astype(x_nchw.dtype)


if __name__ == "__main__":
    key = jax.random.PRNGKey(0)
    kx, k1, k2 = jax.random.split(key, 3)

    B, C, H, W = 2, 4, 16, 16
    Cm = C // 2

    x = jax.random.normal(kx, (B, C, H, W), dtype=jnp.float32)
    # Deterministic synthetic weights with the Conv2d(.., 1, bias=False) shapes.
    w1 = jax.random.normal(k1, (Cm, C, 1, 1), dtype=jnp.float32) * 0.5
    w2 = jax.random.normal(k2, (C, Cm, 1, 1), dtype=jnp.float32) * 0.5

    out = jax.block_until_ready(channel_attention(x, w1, w2))
    ref = reference(x, w1, w2)

    assert out.shape == (B, C, 1, 1)
    assert jnp.allclose(out, ref, atol=1e-5, rtol=1e-4), (out, ref)

    print("KERNEL_OK")
</pallas_src>

<mosaic_0001>
module attributes {stable_mosaic.version = 11 : i64} {
  func.func @_avg_pool_kernel(%arg0: i32, %arg1: i32, %arg2: memref<8x256xf32, #tpu.memory_space<vmem>>, %arg3: memref<8x1xf32, #tpu.memory_space<vmem>>, %arg4: memref<8x128xf32, #tpu.memory_space<vmem>>) attributes {dimension_semantics = [#tpu.dimension_semantics<parallel>, #tpu.dimension_semantics<arbitrary>], iteration_bounds = array<i64: 1, 1>, scalar_prefetch = 0 : i64, scratch_operands = 1 : i64, tpu.core_type = #tpu.core_type<tc>, window_params = [{transform_indices = @transform_0, window_bounds = array<i64: 8, 256>}, {transform_indices = @transform_1, window_bounds = array<i64: 8, 1>}]} {
    %c0_i32 = arith.constant 0 : i32
    %0 = arith.cmpi eq, %arg1, %c0_i32 : i32
    %1 = arith.extui %0 : i1 to i32
    %c0_i32_0 = arith.constant 0 : i32
    %2 = arith.cmpi ne, %1, %c0_i32_0 : i32
    scf.if %2 {
      %cst = arith.constant 0.000000e+00 : f32
      %12 = vector.broadcast %cst : f32 to vector<8x128xf32>
      %c0_9 = arith.constant 0 : index
      %c0_10 = arith.constant 0 : index
      %13 = vector.load %arg4[%c0_9, %c0_10] : memref<8x128xf32, #tpu.memory_space<vmem>>, vector<8x128xf32>
      tpu.vector_store %arg4[%c0_9, %c0_10], %12 {strides = array<i32>} : memref<8x128xf32, #tpu.memory_space<vmem>>, vector<8x128xf32>,
    } else {
    }
    %c0 = arith.constant 0 : index
    %c0_1 = arith.constant 0 : index
    %3 = vector.load %arg2[%c0, %c0_1] : memref<8x256xf32, #tpu.memory_space<vmem>>, vector<8x128xf32>
    %c0_2 = arith.constant 0 : index
    %c128 = arith.constant 128 : index
    %4 = vector.load %arg2[%c0_2, %c128] : memref<8x256xf32, #tpu.memory_space<vmem>>, vector<8x128xf32>
    %5 = arith.addf %3, %4 : vector<8x128xf32>
    %c0_3 = arith.constant 0 : index
    %c0_4 = arith.constant 0 : index
    %6 = vector.load %arg4[%c0_3, %c0_4] : memref<8x128xf32, #tpu.memory_space<vmem>>, vector<8x128xf32>
    %7 = arith.addf %6, %5 : vector<8x128xf32>
    %c0_5 = arith.constant 0 : index
    %c0_6 = arith.constant 0 : index
    %8 = vector.load %arg4[%c0_5, %c0_6] : memref<8x128xf32, #tpu.memory_space<vmem>>, vector<8x128xf32>
    tpu.vector_store %arg4[%c0_5, %c0_6], %7 {strides = array<i32>} : memref<8x128xf32, #tpu.memory_space<vmem>>, vector<8x128xf32>,
    %c0_i32_7 = arith.constant 0 : i32
    %9 = arith.cmpi eq, %arg1, %c0_i32_7 : i32
    %10 = arith.extui %9 : i1 to i32
    %c0_i32_8 = arith.constant 0 : i32
    %11 = arith.cmpi ne, %10, %c0_i32_8 : i32
    scf.if %11 {
      %c0_9 = arith.constant 0 : index
      %c0_10 = arith.constant 0 : index
      %12 = vector.load %arg4[%c0_9, %c0_10] : memref<8x128xf32, #tpu.memory_space<vmem>>, vector<8x128xf32>
      %cst = arith.constant dense<0.000000e+00> : vector<8xf32>
      %13 = vector.multi_reduction <add>, %12, %cst [1] : vector<8x128xf32> to vector<8xf32>
      %14 = vector.shape_cast %13 : vector<8xf32> to vector<8x1xf32>
      %cst_11 = arith.constant 3.906250e-03 : f32
      %15 = vector.broadcast %cst_11 : f32 to vector<8x1xf32>
      %16 = arith.mulf %14, %15 : vector<8x1xf32>
      %c0_12 = arith.constant 0 : index
      %c0_13 = arith.constant 0 : index
      %17 = vector.load %arg3[%c0_12, %c0_13] : memref<8x1xf32, #tpu.memory_space<vmem>>, vector<8x1xf32>
      tpu.vector_store %arg3[%c0_12, %c0_13], %16 {strides = array<i32>} : memref<8x1xf32, #tpu.memory_space<vmem>>, vector<8x1xf32>,
    } else {
    }
    return
  }
  func.func @transform_0(%arg0: i32, %arg1: i32) -> (i32, i32) {
    %c0_i32 = arith.constant 0 : i32
    return %arg0, %arg1 : i32, i32
  }
  func.func @transform_1(%arg0: i32, %arg1: i32) -> (i32, i32) {
    %c0_i32 = arith.constant 0 : i32
    %c0_i32_0 = arith.constant 0 : i32
    return %arg0, %c0_i32 : i32, i32
  }
}

</mosaic_0001>

<llo_original>
// kernel: tpu_custom_call.1
$region0: #{tpu_custom_call.1}
  #allocation0 [shape = 'u32[]', space=smem, size = 0x4, offset = 0x4, fixed_abs, tag = 'smem constant byte address 0x4 - core index']
  #allocation1 [shape = 'u32[144,128]{1,0:T(1,128)}', space=vmem, size = 0x12000, scoped, tag = 'internal scratch']
  #allocation2 [shape = 'f32[8,128]{1,0:T(8,128)}', space=vmem, size = 0x1000, scoped, tag = 'scratch operand']
  %s0 = inlined_call_operand.hbm [shape: f32[8,256], index: 0, kind: input, shape index: {}]
  %s1 = inlined_call_operand.vmem [shape: f32[8,1], index: 1, kind: output, shape index: {}]
  %s2 = sld [smem:[#allocation0]]
  $region26: #{tpu_custom_call.1} parent=0
    _
  %s4 = ssub.s32 1, %s2
  %s5 = scalar_select 0, %s4, %s2
  $region1: #{tpu_custom_call.1} parent=0
    #allocation3 [shape = 'u8[8192]{0}', space=vmem, size = 0x2000, scoped, tag = 'input window, operand 0, single buffered']
    #allocation4 [shape = 's32[1]{0}', space=sflag, size = 0x4, scoped, tag = 'scoped memory for tpu_custom_call.1']
    %6 = vsyncpa [#allocation4], 0
    // Predicated region
    $region2: #{tpu_custom_call.1} parent=1 // pred_check
      _
    $region3: #{tpu_custom_call.1} parent=1 // pred_check_branch
      %8 = sbr.rel (0) target = $region5
    $region4: #{tpu_custom_call.1} parent=1 // pred_region
      %s10 = ssub.s32 256, 256
      %11 = vsyncadd [#allocation4], %s10
      %s13 = sshll.u32 [#allocation3], 4
      %s14 = int_to_ptr.vmem [resolvable:$true] %s13
      %16 = dma.hbm_to_vmem [thread:$0]  %s0, 256, %s14, [#allocation4]
    $region5: #{tpu_custom_call.1} parent=1 // pred_fallthru
      _
    // Predicated region
    $region6: #{tpu_custom_call.1} parent=1 // pred_check
      _
    $region7: #{tpu_custom_call.1} parent=1 // pred_check_branch
      %18 = sbr.rel (0) target = $region9
    $region8: #{tpu_custom_call.1} parent=1 // pred_region
      %19 = dma.done [#allocation4], 256
    $region9: #{tpu_custom_call.1} parent=1 // pred_fallthru
      _
    %p20 = scmp.eq.s32.totalorder 0, 0
    // Predicated region
    $region10: #{tpu_custom_call.1} parent=1 // pred_check
      %p21 = pneg %p20
    $region11: #{tpu_custom_call.1} parent=1 // pred_check_branch
      %23 = sbr.rel (%p21) target = $region13
    $region12: #{tpu_custom_call.1} parent=1 // pred_region
      %24 = vst [vmem:[#allocation2] sm:$0xff] 0.0
    $region13: #{tpu_custom_call.1} parent=1 // pred_fallthru
      _
    %v25 = vld [vmem:[#allocation3] sm:$0xff]
    %v26 = vld [vmem:[#allocation3 + $0x8] sm:$0xff]
    %v27 = vadd.f32 %v25, %v26
    %v28 = vld [vmem:[#allocation2] sm:$0xff]
    %v29 = vadd.f32 %v28, %v27
    %30 = vst [vmem:[#allocation2] sm:$0xff] %v29
    // Predicated region
    $region14: #{tpu_custom_call.1} parent=1 // pred_check
      %p31 = pneg %p20
    $region15: #{tpu_custom_call.1} parent=1 // pred_check_branch
      %33 = sbr.rel (%p31) target = $region17
    $region16: #{tpu_custom_call.1} parent=1 // pred_region
      %v34 = vld [vmem:[#allocation2] sm:$0xff]
      %35 = vadd.xlane.f32.xlu0 %v34
      %v36 = vpop.xlane.xlu0 %35
      %v37 = vmul.f32 %v36, 0.00390625
      %vm38 = vcmask 7168
      %39 = vst.msk [vmem:[%s1] sm:$0xff] %vm38, %v37
    $region17: #{tpu_custom_call.1} parent=1 // pred_fallthru
      _
    // Predicated region
    $region18: #{tpu_custom_call.1} parent=1 // pred_check
      _
    $region19: #{tpu_custom_call.1} parent=1 // pred_check_branch
      %41 = sbr.rel (0) target = $region21
    $region20: #{tpu_custom_call.1} parent=1 // pred_region
      _
    $region21: #{tpu_custom_call.1} parent=1 // pred_fallthru
      _
    // Predicated region
    $region22: #{tpu_custom_call.1} parent=1 // pred_check
      _
    $region23: #{tpu_custom_call.1} parent=1 // pred_check_branch
      %43 = sbr.rel (0) target = $region25
    $region24: #{tpu_custom_call.1} parent=1 // pred_region
      _
    $region25: #{tpu_custom_call.1} parent=1 // pred_fallthru
      _
    %44 = vsyncpa [#allocation4], 1

</llo_original>
